<compile_context>
chip_gen: v5e
topology: v5e:2x2
jax: 0.10.0
libtpu: 0.0.40
codegen_flags: <defaults>
</compile_context>

<pallas_src>
import math
import jax
import jax.numpy as jnp
from jax import lax
from jax.experimental import pallas as pl
from jax.experimental.pallas import tpu as pltpu

S = 8          # sequence length
D_MODEL = 32   # model dim
N_HEADS = 4
D_K = D_MODEL // N_HEADS
D_FF = 64
EPS = 1e-6     # Normalizator eps

# Packed parameter slab layout ([_N_ROWS, 128] f32):
#   rows [0:32)   lanes 0:96  = wqkv (wq|wk|wv),  lanes 96:128 = wo
#   rows [32:64)  lanes 0:64  = w1,               lanes 64:128 = w23^T ((w2@w3).T)
#   row  64       lanes 0:96  = bqkv,             lanes 96:128 = bo
#   row  65       lanes 0:64  = b1,               lanes 64:96  = b23 (= b2@w3 + b3)
#   row  66       lanes 0:4   = [alpha1, gamma1, alpha2, gamma2]
_ROW_WQKV = 0
_ROW_W1 = D_MODEL
_ROW_BIAS = 2 * D_MODEL
_N_ROWS = 72   # padded to a multiple of 8 sublanes


def _normalize(x, alpha, gamma):
    # torch: alpha * (x - mean) / (std + eps) + gamma, std UNBIASED (N-1)
    mean = jnp.mean(x, axis=-1, keepdims=True)
    xc = x - mean
    var = jnp.sum(xc * xc, axis=-1, keepdims=True) * (1.0 / (x.shape[-1] - 1))
    inv = pl.reciprocal(jnp.sqrt(var) + EPS, approx=False)
    return alpha * xc * inv + gamma


def encoder_block_kernel(x_ref, mask_ref, p_ref, out_ref):
    x = x_ref[...]                                      # [S, D]
    # Additive mask, computed once (0 = keep, -1e9 = masked). Equivalent to the
    # reference's masked_fill(mask==0, -1e9) only because |scores| << 1e9 here.
    addmask = (mask_ref[...] - 1.0) * 1.0e9             # [S, S]

    # Unpack the single lane-dense parameter slab. Ref slices are sublane-
    # aligned (offsets 0/32/64) and full 128 lanes; sub-slicing is on values.
    wblk0 = p_ref[_ROW_WQKV:_ROW_WQKV + D_MODEL, :]     # [32,128] wqkv | wo
    wblk1 = p_ref[_ROW_W1:_ROW_W1 + D_MODEL, :]         # [32,128] w1 | w23^T
    bblk = p_ref[_ROW_BIAS:_ROW_BIAS + 8, :]            # [8,128]

    wqkv = wblk0[:, 0:3 * D_MODEL]                      # [32, 96]
    wo = wblk0[:, 3 * D_MODEL:4 * D_MODEL]              # [32, 32]
    w1 = wblk1[:, 0:D_FF]                               # [32, 64]
    w23t = wblk1[:, D_FF:2 * D_FF]                      # [32, 64] = (w2 @ w3).T

    bqkv = bblk[0:1, 0:3 * D_MODEL]                     # [1, 96]
    bo = bblk[0:1, 3 * D_MODEL:4 * D_MODEL]             # [1, 32]
    b1 = bblk[1:2, 0:D_FF]                              # [1, 64]
    b23 = bblk[1:2, D_FF:D_FF + D_MODEL]                # [1, 32]
    a1 = bblk[2:3, 0:1]
    g1 = bblk[2:3, 1:2]
    a2 = bblk[2:3, 2:3]
    g2 = bblk[2:3, 3:4]

    # ---- residual connection 1: self-attention(norm(x)) ----
    xn = _normalize(x, a1, g1)
    qkv = jnp.dot(xn, wqkv, preferred_element_type=jnp.float32) + bqkv  # [S, 3D]

    scale = 1.0 / math.sqrt(D_K)
    q = qkv[:, 0:D_MODEL] * scale                       # fold softmax scale into q
    k = qkv[:, D_MODEL:2 * D_MODEL]
    v = qkv[:, 2 * D_MODEL:3 * D_MODEL]

    heads = []
    for h in range(N_HEADS):                            # static unroll
        sl = slice(h * D_K, (h + 1) * D_K)
        qh = q[:, sl]
        kh = k[:, sl]
        vh = v[:, sl]
        # qh @ kh^T without materializing a transpose
        scores = lax.dot_general(qh, kh, (((1,), (1,)), ((), ())),
                                 preferred_element_type=jnp.float32)
        scores = scores + addmask
        scores = scores - jnp.max(scores, axis=-1, keepdims=True)
        p = jnp.exp(scores)
        p = p * pl.reciprocal(jnp.sum(p, axis=-1, keepdims=True), approx=False)
        heads.append(jnp.dot(p, vh, preferred_element_type=jnp.float32))  # [S, D_K]
    concat = jnp.concatenate(heads, axis=1)             # [S, D]
    attn = jnp.dot(concat, wo, preferred_element_type=jnp.float32) + bo   # single wo matmul
    y = x + attn                                        # dropout = identity

    # ---- residual connection 2: feed_forward(norm(y)) ----
    yn = _normalize(y, a2, g2)
    h1 = jnp.maximum(
        jnp.dot(yn, w1, preferred_element_type=jnp.float32) + b1, 0.0)    # [S, D_FF]
    # h1 @ (w2 @ w3) with the fused weight stored transposed (contract dim 1 vs 1)
    ffn = lax.dot_general(h1, w23t, (((1,), (1,)), ((), ())),
                          preferred_element_type=jnp.float32) + b23       # [S, D]
    out_ref[...] = y + ffn                              # dropout = identity


def pack_params(p):
    """Host-side, one-time packing of all parameters into one [72,128] slab."""
    w23 = p["w2"] @ p["w3"]                              # [D_FF, D_MODEL]
    b23 = p["b2"] @ p["w3"] + p["b3"]                    # [1, D_MODEL]
    wblk0 = jnp.concatenate([p["wq"], p["wk"], p["wv"], p["wo"]], axis=1)   # [32,128]
    wblk1 = jnp.concatenate([p["w1"], w23.T], axis=1)                       # [32,128]
    brow0 = jnp.concatenate([p["bq"], p["bk"], p["bv"], p["bo"]], axis=1)   # [1,128]
    brow1 = jnp.concatenate(
        [p["b1"], b23, jnp.zeros((1, D_MODEL), jnp.float32)], axis=1)       # [1,128]
    brow2 = jnp.zeros((1, 128), jnp.float32).at[0, 0:4].set(p["norm_params"])
    pad = jnp.zeros((_N_ROWS - (2 * D_MODEL + 3), 128), jnp.float32)
    return jnp.concatenate([wblk0, wblk1, brow0, brow1, brow2, pad],
                           axis=0).astype(jnp.float32)   # [72, 128]


def encoder_block(x, mask, packed):
    vmem = pl.BlockSpec(memory_space=pltpu.MemorySpace.VMEM)
    return pl.pallas_call(
        encoder_block_kernel,
        out_shape=jax.ShapeDtypeStruct((S, D_MODEL), jnp.float32),
        in_specs=[vmem, vmem, vmem],
        out_specs=vmem,
    )(x, mask, packed)


def reference_encoder_block(x, mask, p):
    """Pure-JAX mirror of the PyTorch forward, for verification."""
    def norm(z, a, g):
        mean = jnp.mean(z, axis=-1, keepdims=True)
        var = jnp.sum((z - mean) ** 2, axis=-1, keepdims=True) / (z.shape[-1] - 1)
        return a * (z - mean) / (jnp.sqrt(var) + EPS) + g

    a1, g1, a2, g2 = p["norm_params"]
    xn = norm(x, a1, g1)
    q = xn @ p["wq"] + p["bq"]
    k = xn @ p["wk"] + p["bk"]
    v = xn @ p["wv"] + p["bv"]
    q = q.reshape(S, N_HEADS, D_K).transpose(1, 0, 2)
    k = k.reshape(S, N_HEADS, D_K).transpose(1, 0, 2)
    v = v.reshape(S, N_HEADS, D_K).transpose(1, 0, 2)
    scores = jnp.einsum("hsd,htd->hst", q, k) / math.sqrt(D_K)
    scores = jnp.where(mask[None] == 0, -1.0e9, scores)
    scores = jax.nn.softmax(scores, axis=-1)
    o = jnp.einsum("hst,htd->hsd", scores, v).transpose(1, 0, 2).reshape(S, D_MODEL)
    o = o @ p["wo"] + p["bo"]
    y = x + o
    yn = norm(y, a2, g2)
    h = jnp.maximum(yn @ p["w1"] + p["b1"], 0.0)
    h = h @ p["w2"] + p["b2"]
    h = h @ p["w3"] + p["b3"]
    return y + h


def init_params(key):
    keys = jax.random.split(key, 12)
    def w(k, shape):
        return (0.02 * jax.random.normal(k, shape)).astype(jnp.float32)
    return {
        "wq": w(keys[0], (D_MODEL, D_MODEL)), "bq": w(keys[1], (1, D_MODEL)),
        "wk": w(keys[2], (D_MODEL, D_MODEL)), "bk": w(keys[3], (1, D_MODEL)),
        "wv": w(keys[4], (D_MODEL, D_MODEL)), "bv": w(keys[5], (1, D_MODEL)),
        "wo": w(keys[6], (D_MODEL, D_MODEL)), "bo": w(keys[7], (1, D_MODEL)),
        "w1": w(keys[8], (D_MODEL, D_FF)),    "b1": w(keys[9], (1, D_FF)),
        "w2": w(keys[10], (D_FF, D_FF)),      "b2": jnp.zeros((1, D_FF), jnp.float32),
        "w3": w(keys[11], (D_FF, D_MODEL)),   "b3": jnp.zeros((1, D_MODEL), jnp.float32),
        # Normalizator params: alpha=1, gamma=0 (two instances)
        "norm_params": jnp.array([1.0, 0.0, 1.0, 0.0], jnp.float32),
    }


if __name__ == "__main__":
    key = jax.random.PRNGKey(0)
    kx, kp = jax.random.split(key)
    x = jax.random.normal(kx, (S, D_MODEL), dtype=jnp.float32)
    # causal-style src_mask: lower-triangular keep pattern (1 = keep, 0 = mask)
    mask = jnp.tril(jnp.ones((S, S), dtype=jnp.float32))
    params = init_params(kp)
    packed = jax.block_until_ready(pack_params(params))

    out = encoder_block(x, mask, packed)
    out = jax.block_until_ready(out)

    ref = reference_encoder_block(x, mask, params)
    assert out.shape == (S, D_MODEL)
    assert jnp.allclose(out, ref, atol=1e-4, rtol=1e-4), (
        f"max abs err {jnp.max(jnp.abs(out - ref))}")
    print("KERNEL_OK")
</pallas_src>

<mosaic_0001>
module attributes {stable_mosaic.version = 11 : i64} {
  func.func @encoder_block_kernel(%arg0: memref<8x32xf32, #tpu.memory_space<vmem>>, %arg1: memref<8x8xf32, #tpu.memory_space<vmem>>, %arg2: memref<72x128xf32, #tpu.memory_space<vmem>>, %arg3: memref<8x32xf32, #tpu.memory_space<vmem>>) attributes {dimension_semantics = [], scalar_prefetch = 0 : i64, scratch_operands = 0 : i64, tpu.core_type = #tpu.core_type<tc>} {
    %c0 = arith.constant 0 : index
    %c0_0 = arith.constant 0 : index
    %0 = vector.load %arg0[%c0, %c0_0] : memref<8x32xf32, #tpu.memory_space<vmem>>, vector<8x32xf32>
    %c0_1 = arith.constant 0 : index
    %c0_2 = arith.constant 0 : index
    %1 = vector.load %arg1[%c0_1, %c0_2] : memref<8x8xf32, #tpu.memory_space<vmem>>, vector<8x8xf32>
    %cst = arith.constant 1.000000e+00 : f32
    %2 = vector.broadcast %cst : f32 to vector<8x8xf32>
    %3 = arith.subf %1, %2 : vector<8x8xf32>
    %cst_3 = arith.constant 1.000000e+09 : f32
    %4 = vector.broadcast %cst_3 : f32 to vector<8x8xf32>
    %5 = arith.mulf %3, %4 : vector<8x8xf32>
    %c0_4 = arith.constant 0 : index
    %c0_5 = arith.constant 0 : index
    %6 = vector.load %arg2[%c0_4, %c0_5] : memref<72x128xf32, #tpu.memory_space<vmem>>, vector<32x128xf32>
    %c32 = arith.constant 32 : index
    %c0_6 = arith.constant 0 : index
    %7 = vector.load %arg2[%c32, %c0_6] : memref<72x128xf32, #tpu.memory_space<vmem>>, vector<32x128xf32>
    %c64 = arith.constant 64 : index
    %c0_7 = arith.constant 0 : index
    %8 = vector.load %arg2[%c64, %c0_7] : memref<72x128xf32, #tpu.memory_space<vmem>>, vector<8x128xf32>
    %9 = vector.extract_strided_slice %6 {offsets = [0, 0], sizes = [32, 96], strides = [1, 1]} : vector<32x128xf32> to vector<32x96xf32>
    %10 = vector.extract_strided_slice %6 {offsets = [0, 96], sizes = [32, 32], strides = [1, 1]} : vector<32x128xf32> to vector<32x32xf32>
    %11 = vector.extract_strided_slice %7 {offsets = [0, 0], sizes = [32, 64], strides = [1, 1]} : vector<32x128xf32> to vector<32x64xf32>
    %12 = vector.extract_strided_slice %7 {offsets = [0, 64], sizes = [32, 64], strides = [1, 1]} : vector<32x128xf32> to vector<32x64xf32>
    %13 = vector.extract_strided_slice %8 {offsets = [0, 0], sizes = [1, 96], strides = [1, 1]} : vector<8x128xf32> to vector<1x96xf32>
    %14 = vector.extract_strided_slice %8 {offsets = [0, 96], sizes = [1, 32], strides = [1, 1]} : vector<8x128xf32> to vector<1x32xf32>
    %15 = vector.extract_strided_slice %8 {offsets = [1, 0], sizes = [1, 64], strides = [1, 1]} : vector<8x128xf32> to vector<1x64xf32>
    %16 = vector.extract_strided_slice %8 {offsets = [1, 64], sizes = [1, 32], strides = [1, 1]} : vector<8x128xf32> to vector<1x32xf32>
    %17 = vector.extract_strided_slice %8 {offsets = [2, 0], sizes = [1, 1], strides = [1, 1]} : vector<8x128xf32> to vector<1x1xf32>
    %18 = vector.extract_strided_slice %8 {offsets = [2, 1], sizes = [1, 1], strides = [1, 1]} : vector<8x128xf32> to vector<1x1xf32>
    %19 = vector.extract_strided_slice %8 {offsets = [2, 2], sizes = [1, 1], strides = [1, 1]} : vector<8x128xf32> to vector<1x1xf32>
    %20 = vector.extract_strided_slice %8 {offsets = [2, 3], sizes = [1, 1], strides = [1, 1]} : vector<8x128xf32> to vector<1x1xf32>
    %cst_8 = arith.constant dense<0.000000e+00> : vector<8xf32>
    %21 = vector.multi_reduction <add>, %0, %cst_8 [1] : vector<8x32xf32> to vector<8xf32>
    %22 = vector.shape_cast %21 : vector<8xf32> to vector<8x1xf32>
    %cst_9 = arith.constant 3.200000e+01 : f32
    %23 = vector.broadcast %cst_9 : f32 to vector<8x1xf32>
    %24 = arith.divf %22, %23 : vector<8x1xf32>
    %25 = vector.broadcast %24 : vector<8x1xf32> to vector<8x32xf32>
    %26 = arith.subf %0, %25 : vector<8x32xf32>
    %27 = arith.mulf %26, %26 : vector<8x32xf32>
    %cst_10 = arith.constant dense<0.000000e+00> : vector<8xf32>
    %28 = vector.multi_reduction <add>, %27, %cst_10 [1] : vector<8x32xf32> to vector<8xf32>
    %29 = vector.shape_cast %28 : vector<8xf32> to vector<8x1xf32>
    %cst_11 = arith.constant 0.0322580636 : f32
    %30 = vector.broadcast %cst_11 : f32 to vector<8x1xf32>
    %31 = arith.mulf %29, %30 : vector<8x1xf32>
    %32 = math.sqrt %31 : vector<8x1xf32>
    %cst_12 = arith.constant 9.99999997E-7 : f32
    %33 = vector.broadcast %cst_12 : f32 to vector<8x1xf32>
    %34 = arith.addf %32, %33 : vector<8x1xf32>
    %35 = tpu.reciprocal %34 : vector<8x1xf32> -> vector<8x1xf32>
    %36 = vector.broadcast %17 : vector<1x1xf32> to vector<8x32xf32>
    %37 = arith.mulf %36, %26 : vector<8x32xf32>
    %38 = vector.broadcast %35 : vector<8x1xf32> to vector<8x32xf32>
    %39 = arith.mulf %37, %38 : vector<8x32xf32>
    %40 = vector.broadcast %18 : vector<1x1xf32> to vector<8x32xf32>
    %41 = arith.addf %39, %40 : vector<8x32xf32>
    %cst_13 = arith.constant dense<0.000000e+00> : vector<8x96xf32>
    %42 = tpu.matmul %41, %9, %cst_13 {dimension_numbers = #tpu.dot_dimension_numbers<[1], [0], [0], [1], [0, 0, 1, 1], [], []>} : vector<8x32xf32>, vector<32x96xf32>, vector<8x96xf32> -> vector<8x96xf32>
    %43 = vector.broadcast %13 : vector<1x96xf32> to vector<8x96xf32>
    %44 = arith.addf %42, %43 : vector<8x96xf32>
    %45 = vector.extract_strided_slice %44 {offsets = [0, 0], sizes = [8, 32], strides = [1, 1]} : vector<8x96xf32> to vector<8x32xf32>
    %cst_14 = arith.constant 0.353553385 : f32
    %46 = vector.broadcast %cst_14 : f32 to vector<8x32xf32>
    %47 = arith.mulf %45, %46 : vector<8x32xf32>
    %48 = vector.extract_strided_slice %44 {offsets = [0, 32], sizes = [8, 32], strides = [1, 1]} : vector<8x96xf32> to vector<8x32xf32>
    %49 = vector.extract_strided_slice %44 {offsets = [0, 64], sizes = [8, 32], strides = [1, 1]} : vector<8x96xf32> to vector<8x32xf32>
    %50 = vector.extract_strided_slice %47 {offsets = [0, 0], sizes = [8, 8], strides = [1, 1]} : vector<8x32xf32> to vector<8x8xf32>
    %51 = vector.extract_strided_slice %48 {offsets = [0, 0], sizes = [8, 8], strides = [1, 1]} : vector<8x32xf32> to vector<8x8xf32>
    %52 = vector.extract_strided_slice %49 {offsets = [0, 0], sizes = [8, 8], strides = [1, 1]} : vector<8x32xf32> to vector<8x8xf32>
    %cst_15 = arith.constant dense<0.000000e+00> : vector<8x8xf32>
    %53 = tpu.matmul %50, %51, %cst_15 {dimension_numbers = #tpu.dot_dimension_numbers<[1], [1], [0], [0], [0, 0, 1, 0], [], []>} : vector<8x8xf32>, vector<8x8xf32>, vector<8x8xf32> -> vector<8x8xf32>
    %54 = arith.addf %53, %5 : vector<8x8xf32>
    %cst_16 = arith.constant dense<0xFF800000> : vector<8xf32>
    %55 = vector.multi_reduction <maximumf>, %54, %cst_16 [1] : vector<8x8xf32> to vector<8xf32>
    %56 = vector.shape_cast %55 : vector<8xf32> to vector<8x1xf32>
    %57 = vector.broadcast %56 : vector<8x1xf32> to vector<8x8xf32>
    %58 = arith.subf %54, %57 : vector<8x8xf32>
    %59 = math.exp %58 : vector<8x8xf32>
    %cst_17 = arith.constant dense<0.000000e+00> : vector<8xf32>
    %60 = vector.multi_reduction <add>, %59, %cst_17 [1] : vector<8x8xf32> to vector<8xf32>
    %61 = vector.shape_cast %60 : vector<8xf32> to vector<8x1xf32>
    %62 = tpu.reciprocal %61 : vector<8x1xf32> -> vector<8x1xf32>
    %63 = vector.broadcast %62 : vector<8x1xf32> to vector<8x8xf32>
    %64 = arith.mulf %59, %63 : vector<8x8xf32>
    %cst_18 = arith.constant dense<0.000000e+00> : vector<8x8xf32>
    %65 = tpu.matmul %64, %52, %cst_18 {dimension_numbers = #tpu.dot_dimension_numbers<[1], [0], [0], [1], [0, 0, 1, 1], [], []>} : vector<8x8xf32>, vector<8x8xf32>, vector<8x8xf32> -> vector<8x8xf32>
    %66 = vector.extract_strided_slice %47 {offsets = [0, 8], sizes = [8, 8], strides = [1, 1]} : vector<8x32xf32> to vector<8x8xf32>
    %67 = vector.extract_strided_slice %48 {offsets = [0, 8], sizes = [8, 8], strides = [1, 1]} : vector<8x32xf32> to vector<8x8xf32>
    %68 = vector.extract_strided_slice %49 {offsets = [0, 8], sizes = [8, 8], strides = [1, 1]} : vector<8x32xf32> to vector<8x8xf32>
    %cst_19 = arith.constant dense<0.000000e+00> : vector<8x8xf32>
    %69 = tpu.matmul %66, %67, %cst_19 {dimension_numbers = #tpu.dot_dimension_numbers<[1], [1], [0], [0], [0, 0, 1, 0], [], []>} : vector<8x8xf32>, vector<8x8xf32>, vector<8x8xf32> -> vector<8x8xf32>
    %70 = arith.addf %69, %5 : vector<8x8xf32>
    %cst_20 = arith.constant dense<0xFF800000> : vector<8xf32>
    %71 = vector.multi_reduction <maximumf>, %70, %cst_20 [1] : vector<8x8xf32> to vector<8xf32>
    %72 = vector.shape_cast %71 : vector<8xf32> to vector<8x1xf32>
    %73 = vector.broadcast %72 : vector<8x1xf32> to vector<8x8xf32>
    %74 = arith.subf %70, %73 : vector<8x8xf32>
    %75 = math.exp %74 : vector<8x8xf32>
    %cst_21 = arith.constant dense<0.000000e+00> : vector<8xf32>
    %76 = vector.multi_reduction <add>, %75, %cst_21 [1] : vector<8x8xf32> to vector<8xf32>
    %77 = vector.shape_cast %76 : vector<8xf32> to vector<8x1xf32>
    %78 = tpu.reciprocal %77 : vector<8x1xf32> -> vector<8x1xf32>
    %79 = vector.broadcast %78 : vector<8x1xf32> to vector<8x8xf32>
    %80 = arith.mulf %75, %79 : vector<8x8xf32>
    %cst_22 = arith.constant dense<0.000000e+00> : vector<8x8xf32>
    %81 = tpu.matmul %80, %68, %cst_22 {dimension_numbers = #tpu.dot_dimension_numbers<[1], [0], [0], [1], [0, 0, 1, 1], [], []>} : vector<8x8xf32>, vector<8x8xf32>, vector<8x8xf32> -> vector<8x8xf32>
    %82 = vector.extract_strided_slice %47 {offsets = [0, 16], sizes = [8, 8], strides = [1, 1]} : vector<8x32xf32> to vector<8x8xf32>
    %83 = vector.extract_strided_slice %48 {offsets = [0, 16], sizes = [8, 8], strides = [1, 1]} : vector<8x32xf32> to vector<8x8xf32>
    %84 = vector.extract_strided_slice %49 {offsets = [0, 16], sizes = [8, 8], strides = [1, 1]} : vector<8x32xf32> to vector<8x8xf32>
    %cst_23 = arith.constant dense<0.000000e+00> : vector<8x8xf32>
    %85 = tpu.matmul %82, %83, %cst_23 {dimension_numbers = #tpu.dot_dimension_numbers<[1], [1], [0], [0], [0, 0, 1, 0], [], []>} : vector<8x8xf32>, vector<8x8xf32>, vector<8x8xf32> -> vector<8x8xf32>
    %86 = arith.addf %85, %5 : vector<8x8xf32>
    %cst_24 = arith.constant dense<0xFF800000> : vector<8xf32>
    %87 = vector.multi_reduction <maximumf>, %86, %cst_24 [1] : vector<8x8xf32> to vector<8xf32>
    %88 = vector.shape_cast %87 : vector<8xf32> to vector<8x1xf32>
    %89 = vector.broadcast %88 : vector<8x1xf32> to vector<8x8xf32>
    %90 = arith.subf %86, %89 : vector<8x8xf32>
    %91 = math.exp %90 : vector<8x8xf32>
    %cst_25 = arith.constant dense<0.000000e+00> : vector<8xf32>
    %92 = vector.multi_reduction <add>, %91, %cst_25 [1] : vector<8x8xf32> to vector<8xf32>
    %93 = vector.shape_cast %92 : vector<8xf32> to vector<8x1xf32>
    %94 = tpu.reciprocal %93 : vector<8x1xf32> -> vector<8x1xf32>
    %95 = vector.broadcast %94 : vector<8x1xf32> to vector<8x8xf32>
    %96 = arith.mulf %91, %95 : vector<8x8xf32>
    %cst_26 = arith.constant dense<0.000000e+00> : vector<8x8xf32>
    %97 = tpu.matmul %96, %84, %cst_26 {dimension_numbers = #tpu.dot_dimension_numbers<[1], [0], [0], [1], [0, 0, 1, 1], [], []>} : vector<8x8xf32>, vector<8x8xf32>, vector<8x8xf32> -> vector<8x8xf32>
    %98 = vector.extract_strided_slice %47 {offsets = [0, 24], sizes = [8, 8], strides = [1, 1]} : vector<8x32xf32> to vector<8x8xf32>
    %99 = vector.extract_strided_slice %48 {offsets = [0, 24], sizes = [8, 8], strides = [1, 1]} : vector<8x32xf32> to vector<8x8xf32>
    %100 = vector.extract_strided_slice %49 {offsets = [0, 24], sizes = [8, 8], strides = [1, 1]} : vector<8x32xf32> to vector<8x8xf32>
    %cst_27 = arith.constant dense<0.000000e+00> : vector<8x8xf32>
    %101 = tpu.matmul %98, %99, %cst_27 {dimension_numbers = #tpu.dot_dimension_numbers<[1], [1], [0], [0], [0, 0, 1, 0], [], []>} : vector<8x8xf32>, vector<8x8xf32>, vector<8x8xf32> -> vector<8x8xf32>
    %102 = arith.addf %101, %5 : vector<8x8xf32>
    %cst_28 = arith.constant dense<0xFF800000> : vector<8xf32>
    %103 = vector.multi_reduction <maximumf>, %102, %cst_28 [1] : vector<8x8xf32> to vector<8xf32>
    %104 = vector.shape_cast %103 : vector<8xf32> to vector<8x1xf32>
    %105 = vector.broadcast %104 : vector<8x1xf32> to vector<8x8xf32>
    %106 = arith.subf %102, %105 : vector<8x8xf32>
    %107 = math.exp %106 : vector<8x8xf32>
    %cst_29 = arith.constant dense<0.000000e+00> : vector<8xf32>
    %108 = vector.multi_reduction <add>, %107, %cst_29 [1] : vector<8x8xf32> to vector<8xf32>
    %109 = vector.shape_cast %108 : vector<8xf32> to vector<8x1xf32>
    %110 = tpu.reciprocal %109 : vector<8x1xf32> -> vector<8x1xf32>
    %111 = vector.broadcast %110 : vector<8x1xf32> to vector<8x8xf32>
    %112 = arith.mulf %107, %111 : vector<8x8xf32>
    %cst_30 = arith.constant dense<0.000000e+00> : vector<8x8xf32>
    %113 = tpu.matmul %112, %100, %cst_30 {dimension_numbers = #tpu.dot_dimension_numbers<[1], [0], [0], [1], [0, 0, 1, 1], [], []>} : vector<8x8xf32>, vector<8x8xf32>, vector<8x8xf32> -> vector<8x8xf32>
    %114 = tpu.concatenate %65, %81, %97, %113 in 1 : vector<8x8xf32>, vector<8x8xf32>, vector<8x8xf32>, vector<8x8xf32> -> vector<8x32xf32>
    %cst_31 = arith.constant dense<0.000000e+00> : vector<8x32xf32>
    %115 = tpu.matmul %114, %10, %cst_31 {dimension_numbers = #tpu.dot_dimension_numbers<[1], [0], [0], [1], [0, 0, 1, 1], [], []>} : vector<8x32xf32>, vector<32x32xf32>, vector<8x32xf32> -> vector<8x32xf32>
    %116 = vector.broadcast %14 : vector<1x32xf32> to vector<8x32xf32>
    %117 = arith.addf %115, %116 : vector<8x32xf32>
    %118 = arith.addf %0, %117 : vector<8x32xf32>
    %cst_32 = arith.constant dense<0.000000e+00> : vector<8xf32>
    %119 = vector.multi_reduction <add>, %118, %cst_32 [1] : vector<8x32xf32> to vector<8xf32>
    %120 = vector.shape_cast %119 : vector<8xf32> to vector<8x1xf32>
    %cst_33 = arith.constant 3.200000e+01 : f32
    %121 = vector.broadcast %cst_33 : f32 to vector<8x1xf32>
    %122 = arith.divf %120, %121 : vector<8x1xf32>
    %123 = vector.broadcast %122 : vector<8x1xf32> to vector<8x32xf32>
    %124 = arith.subf %118, %123 : vector<8x32xf32>
    %125 = arith.mulf %124, %124 : vector<8x32xf32>
    %cst_34 = arith.constant dense<0.000000e+00> : vector<8xf32>
    %126 = vector.multi_reduction <add>, %125, %cst_34 [1] : vector<8x32xf32> to vector<8xf32>
    %127 = vector.shape_cast %126 : vector<8xf32> to vector<8x1xf32>
    %cst_35 = arith.constant 0.0322580636 : f32
    %128 = vector.broadcast %cst_35 : f32 to vector<8x1xf32>
    %129 = arith.mulf %127, %128 : vector<8x1xf32>
    %130 = math.sqrt %129 : vector<8x1xf32>
    %cst_36 = arith.constant 9.99999997E-7 : f32
    %131 = vector.broadcast %cst_36 : f32 to vector<8x1xf32>
    %132 = arith.addf %130, %131 : vector<8x1xf32>
    %133 = tpu.reciprocal %132 : vector<8x1xf32> -> vector<8x1xf32>
    %134 = vector.broadcast %19 : vector<1x1xf32> to vector<8x32xf32>
    %135 = arith.mulf %134, %124 : vector<8x32xf32>
    %136 = vector.broadcast %133 : vector<8x1xf32> to vector<8x32xf32>
    %137 = arith.mulf %135, %136 : vector<8x32xf32>
    %138 = vector.broadcast %20 : vector<1x1xf32> to vector<8x32xf32>
    %139 = arith.addf %137, %138 : vector<8x32xf32>
    %cst_37 = arith.constant dense<0.000000e+00> : vector<8x64xf32>
    %140 = tpu.matmul %139, %11, %cst_37 {dimension_numbers = #tpu.dot_dimension_numbers<[1], [0], [0], [1], [0, 0, 1, 1], [], []>} : vector<8x32xf32>, vector<32x64xf32>, vector<8x64xf32> -> vector<8x64xf32>
    %141 = vector.broadcast %15 : vector<1x64xf32> to vector<8x64xf32>
    %142 = arith.addf %140, %141 : vector<8x64xf32>
    %cst_38 = arith.constant 0.000000e+00 : f32
    %143 = vector.broadcast %cst_38 : f32 to vector<8x64xf32>
    %144 = arith.maximumf %142, %143 : vector<8x64xf32>
    %cst_39 = arith.constant dense<0.000000e+00> : vector<8x32xf32>
    %145 = tpu.matmul %144, %12, %cst_39 {dimension_numbers = #tpu.dot_dimension_numbers<[1], [1], [0], [0], [0, 0, 1, 0], [], []>} : vector<8x64xf32>, vector<32x64xf32>, vector<8x32xf32> -> vector<8x32xf32>
    %146 = vector.broadcast %16 : vector<1x32xf32> to vector<8x32xf32>
    %147 = arith.addf %145, %146 : vector<8x32xf32>
    %148 = arith.addf %118, %147 : vector<8x32xf32>
    %c0_40 = arith.constant 0 : index
    %c0_41 = arith.constant 0 : index
    %149 = vector.load %arg3[%c0_40, %c0_41] : memref<8x32xf32, #tpu.memory_space<vmem>>, vector<8x32xf32>
    tpu.vector_store %arg3[%c0_40, %c0_41], %148 {strides = array<i32>} : memref<8x32xf32, #tpu.memory_space<vmem>>, vector<8x32xf32>,
    return
  }
}

</mosaic_0001>

<llo_original>
// kernel: tpu_custom_call.1
$region0: #{tpu_custom_call.1}
  #allocation0 [shape = 'u32[]', space=smem, size = 0x4, offset = 0x4, fixed_abs, tag = 'smem constant byte address 0x4 - core index']
  #allocation1 [shape = 'u32[72,128]{1,0:T(1,128)}', space=vmem, size = 0x9000, scoped, tag = 'internal scratch']
  %s0 = inlined_call_operand.hbm [shape: f32[8,32], index: 0, kind: input, shape index: {}]
  %s1 = inlined_call_operand.hbm [shape: f32[8,8], index: 1, kind: input, shape index: {}]
  %s2 = inlined_call_operand.hbm [shape: f32[72,128], index: 2, kind: input, shape index: {}]
  %s3 = inlined_call_operand.hbm [shape: f32[8,32], index: 3, kind: output, shape index: {}]
  %s4 = sld [smem:[#allocation0]]
  $region34: #{tpu_custom_call.1} parent=0
    _
  %s6 = ssub.s32 1, %s4
  %s7 = scalar_select 0, %s6, %s4
  $region1: #{tpu_custom_call.1} parent=0
    #allocation2 [shape = 'u8[4096]{0}', space=vmem, size = 0x1000, scoped, tag = 'input window, operand 0, single buffered']
    #allocation3 [shape = 's32[1]{0}', space=sflag, size = 0x4, scoped, tag = 'scoped memory for tpu_custom_call.1']
    #allocation4 [shape = 's32[1]{0}', space=sflag, size = 0x4, scoped, tag = 'scoped memory for tpu_custom_call.1']
    #allocation5 [shape = 'u8[4096]{0}', space=vmem, size = 0x1000, scoped, tag = 'input window, operand 1, single buffered']
    #allocation6 [shape = 's32[1]{0}', space=sflag, size = 0x4, scoped, tag = 'scoped memory for tpu_custom_call.1']
    #allocation7 [shape = 'u8[36864]{0}', space=vmem, size = 0x9000, scoped, tag = 'input window, operand 2, single buffered']
    #allocation8 [shape = 'u8[4096]{0}', space=vmem, size = 0x1000, scoped, tag = 'output window, operand 0, single buffered']
    %8 = vsyncpa [#allocation3], 0
    %9 = vsyncpa [#allocation6], 0
    %10 = vsyncpa [#allocation4], 0
    // Predicated region
    $region2: #{tpu_custom_call.1} parent=1 // pred_check
      _
    $region3: #{tpu_custom_call.1} parent=1 // pred_check_branch
      %12 = sbr.rel (0) target = $region5
    $region4: #{tpu_custom_call.1} parent=1 // pred_region
      %14 = vsyncadd [#allocation3], 0
      %s16 = sshll.u32 %s0, 4
      %s17 = int_to_ptr.hbm [resolvable:$true] %s16
      %s18 = sshll.u32 [#allocation2], 4
      %s19 = int_to_ptr.vmem [resolvable:$true] %s18
      %21 = dma.hbm_to_vmem [thread:$0]  %s17, 128, %s19, [#allocation3]
    $region5: #{tpu_custom_call.1} parent=1 // pred_fallthru
      _
    // Predicated region
    $region6: #{tpu_custom_call.1} parent=1 // pred_check
      _
    $region7: #{tpu_custom_call.1} parent=1 // pred_check_branch
      %23 = sbr.rel (0) target = $region9
    $region8: #{tpu_custom_call.1} parent=1 // pred_region
      %25 = vsyncadd [#allocation6], 0
      %s27 = sshll.u32 %s1, 4
      %s28 = int_to_ptr.hbm [resolvable:$true] %s27
      %s29 = sshll.u32 [#allocation5], 4
      %s30 = int_to_ptr.vmem [resolvable:$true] %s29
      %32 = dma.hbm_to_vmem [thread:$0]  %s28, 128, %s30, [#allocation6]
    $region9: #{tpu_custom_call.1} parent=1 // pred_fallthru
      _
    // Predicated region
    $region10: #{tpu_custom_call.1} parent=1 // pred_check
      _
    $region11: #{tpu_custom_call.1} parent=1 // pred_check_branch
      %34 = sbr.rel (0) target = $region13
    $region12: #{tpu_custom_call.1} parent=1 // pred_region
      %36 = vsyncadd [#allocation6], 0
      %s37 = sshll.u32 %s2, 4
      %s38 = int_to_ptr.hbm [resolvable:$true] %s37
      %s39 = sshll.u32 [#allocation7], 4
      %s40 = int_to_ptr.vmem [resolvable:$true] %s39
      %45 = dma.hbm_to_vmem [thread:$0]  %s38, 1152, %s40, [#allocation6], 128, 128, 8
    $region13: #{tpu_custom_call.1} parent=1 // pred_fallthru
      _
    // Predicated region
    $region14: #{tpu_custom_call.1} parent=1 // pred_check
      _
    $region15: #{tpu_custom_call.1} parent=1 // pred_check_branch
      %47 = sbr.rel (0) target = $region17
    $region16: #{tpu_custom_call.1} parent=1 // pred_region
      %49 = dma.done [#allocation3], 128
    $region17: #{tpu_custom_call.1} parent=1 // pred_fallthru
      _
    // Predicated region
    $region18: #{tpu_custom_call.1} parent=1 // pred_check
      _
    $region19: #{tpu_custom_call.1} parent=1 // pred_check_branch
      %51 = sbr.rel (0) target = $region21
    $region20: #{tpu_custom_call.1} parent=1 // pred_region
      %53 = dma.done [#allocation6], 128
    $region21: #{tpu_custom_call.1} parent=1 // pred_fallthru
      _
    // Predicated region
    $region22: #{tpu_custom_call.1} parent=1 // pred_check
      _
    $region23: #{tpu_custom_call.1} parent=1 // pred_check_branch
      %55 = sbr.rel (0) target = $region25
    $region24: #{tpu_custom_call.1} parent=1 // pred_region
      %57 = dma.done [#allocation6], 1152
    $region25: #{tpu_custom_call.1} parent=1 // pred_fallthru
      _
    %v58 = vld [vmem:[#allocation2] sm:$0xff]
    %v59 = vld [vmem:[#allocation5] sm:$0xff]
    %v60 = vsub.f32 %v59, 1.0
    %v61 = vmul.f32 %v60, 1e+09
    %v62 = vld [vmem:[#allocation7] sm:$0xff]
    %v63 = vld [vmem:[#allocation7 + $0x8] sm:$0xff]
    %v64 = vld [vmem:[#allocation7 + $0x10] sm:$0xff]
    %v65 = vld [vmem:[#allocation7 + $0x18] sm:$0xff]
    %v66 = vld [vmem:[#allocation7 + $0x20] sm:$0xff]
    %v67 = vld [vmem:[#allocation7 + $0x28] sm:$0xff]
    %v68 = vld [vmem:[#allocation7 + $0x30] sm:$0xff]
    %v69 = vld [vmem:[#allocation7 + $0x38] sm:$0xff]
    %v70 = vld [vmem:[#allocation7 + $0x40] sm:$0xff]
    %vm71 = vcmask 261120
    %v72 = vsel %vm71, %v58, 0.0
    %73 = vadd.xlane.f32.xlu0 %v72
    %v74 = vpop.xlane.xlu0 %73
    %v75 = vrcp.pop 32.0
    %v76 = vmul.f32 32.0, %v75
    %v77 = vsub.f32 1.0, %v76
    %v78 = vmul.f32 %v75, %v77
    %v79 = vadd.f32 %v75, %v78
    %vm80 = vweird.f32 %v75
    %v81 = vsel %vm80, %v75, %v79
    %v82 = vmul.f32 %v74, %v81
    %v83 = vsub.f32 %v58, %v82
    %v84 = vmul.f32 %v83, %v83
    %v85 = vsel %vm71, %v84, 0.0
    %86 = vadd.xlane.f32.xlu0 %v85
    %v87 = vpop.xlane.xlu0 %86
    %v88 = vmul.f32 %v87, 0.032258064
    %v89 = vrsqrt.pop %v88
    %v90 = vmul.f32 %v89, %v88
    %v91 = vmul.f32 %v90, %v89
    %v92 = vmul.f32 0.5, %v91
    %v93 = vsub.f32 1.5, %v92
    %v94 = vmul.f32 %v89, %v93
    %v95 = vmul.f32 %v88, %v94
    %vm96 = vcmp.eq.f32.partialorder %v88, inf
    %v97 = vsel %vm96, %v88, %v95
    %vm98 = vcmp.eq.f32.partialorder %v88, 0.0
    %v99 = vand.u32 %v88, 2147483648
    %v100 = vsel %vm98, %v99, %v97
    %v101 = vadd.f32 %v100, 1e-06
    %v102 = vrcp.pop %v101
    %v103 = vmul.f32 %v101, %v102
    %v104 = vsub.f32 1.0, %v103
    %v105 = vmul.f32 %v102, %v104
    %v106 = vadd.f32 %v102, %v105
    %vm107 = vweird.f32 %v101
    %vm108 = vweird.f32 %v102
    %vm109 = vmor %vm107, %vm108
    %v110 = vsel %vm109, %v102, %v106
    %v111 = vand.u32 2147483647, %v101
    %vm112 = vcmp.eq.f32.partialorder %v111, 8.507059e+37
    %v113 = vand.u32 %v101, 2147483648
    %v114 = vor.u32 1.1754944e-38, %v113
    %v115 = vsel %vm112, %v114, %v110
    %v117 = vrot.slane %v70, 2
    %s118 = vtos %v117
    %v119 = vstv %s118
    %v121 = vmul.f32 %v119, %v83
    %v122 = vmul.f32 %v121, %v115
    %123 = vrot.lane.b32.xlu0 %v117, 127
    %v124 = vpop.permute.xlu0 %123
    %s125 = vtos %v124
    %v126 = vstv %s125
    %v128 = vadd.f32 %v122, %v126
    %v129 = vperm.slane %v70, 0
    %v131 = vsel %vm71, %v128, 0
    %133 = vmatpush.msra.mxu0 0.0
    %134 = vmatpush.msra.mxu0 0.0
    %135 = vmatpush.msra.mxu0 0.0
    %136 = vmatpush.msra.mxu0 0.0
    %137 = vmatpush.msra.mxu0 0.0
    %138 = vmatpush.msra.mxu0 0.0
    %139 = vmatpush.msra.mxu0 0.0
    %140 = vmatpush.msra.mxu0 0.0
    %141 = vmatpush.msra.mxu0 0.0
    %142 = vmatpush.msra.mxu0 0.0
    %143 = vmatpush.msra.mxu0 0.0
    %144 = vmatpush.msra.mxu0 0.0
    %145 = vmatpush.msra.mxu0 %v65
    %146 = vmatpush.msra.mxu0 %v64
    %147 = vmatpush.msra.mxu0 %v63
    %148 = vmatpush.msra.mxu0 %v62
    %149 = vmatmul.f32.gmra.mxu0 %v131
    %v150 = vpop.f32.mrf.mxu0
    %v151 = vadd.f32 %v129, %v150
    %152 = vdwg.mxu0
    %v153 = vmul.f32 %v151, 0.35355338
    %155 = vrot.lane.b32.xlu0 %v151, 96
    %v156 = vpop.permute.xlu0 %155
    %vm157 = vcmask 64512
    %v159 = vsel %vm157, %v153, 0
    %v161 = vsel %vm157, %v156, 0
    %163 = vmatpush.xpose.msra.mxu0 0.0
    %164 = vmatpush.xpose.msra.mxu0 0.0
    %165 = vmatpush.xpose.msra.mxu0 0.0
    %166 = vmatpush.xpose.msra.mxu0 0.0
    %167 = vmatpush.xpose.msra.mxu0 0.0
    %168 = vmatpush.xpose.msra.mxu0 0.0
    %169 = vmatpush.xpose.msra.mxu0 0.0
    %170 = vmatpush.xpose.msra.mxu0 0.0
    %171 = vmatpush.xpose.msra.mxu0 0.0
    %172 = vmatpush.xpose.msra.mxu0 0.0
    %173 = vmatpush.xpose.msra.mxu0 0.0
    %174 = vmatpush.xpose.msra.mxu0 0.0
    %175 = vmatpush.xpose.msra.mxu0 0.0
    %176 = vmatpush.xpose.msra.mxu0 0.0
    %177 = vmatpush.xpose.msra.mxu0 0.0
    %178 = vmatpush.xpose.msra.mxu0 %v161
    %179 = vmatmul.f32.gmra.mxu0 %v159
    %v180 = vpop.f32.mrf.mxu0
    %v181 = vadd.f32 %v61, %v180
    %182 = vdwg.mxu0
    %v183 = vsel %vm157, %v181, -inf
    %184 = vmax.xlane.f32.xlu0 %v183
    %v185 = vpop.xlane.xlu0 %184
    %v186 = vsub.f32 %v181, %v185
    %v187 = vmul.f32 %v186, 1.442695
    %v188 = vpow.pop %v187
    %v189 = vsel %vm157, %v188, 0.0
    %190 = vadd.xlane.f32.xlu0 %v189
    %v191 = vpop.xlane.xlu0 %190
    %v192 = vrcp.pop %v191
    %v193 = vmul.f32 %v191, %v192
    %v194 = vsub.f32 1.0, %v193
    %v195 = vmul.f32 %v192, %v194
    %v196 = vadd.f32 %v192, %v195
    %vm197 = vweird.f32 %v191
    %vm198 = vweird.f32 %v192
    %vm199 = vmor %vm197, %vm198
    %v200 = vsel %vm199, %v192, %v196
    %v201 = vand.u32 2147483647, %v191
    %vm202 = vcmp.eq.f32.partialorder %v201, 8.507059e+37
    %v203 = vand.u32 %v191, 2147483648
    %v204 = vor.u32 1.1754944e-38, %v203
    %v205 = vsel %vm202, %v204, %v200
    %v206 = vmul.f32 %v188, %v205
    %207 = vrot.lane.b32.xlu0 %v151, 64
    %v208 = vpop.permute.xlu0 %207
    %v211 = vsel %vm157, %v206, 0
    %213 = vmatpush.msra.mxu0 0.0
    %214 = vmatpush.msra.mxu0 0.0
    %215 = vmatpush.msra.mxu0 0.0
    %216 = vmatpush.msra.mxu0 0.0
    %217 = vmatpush.msra.mxu0 0.0
    %218 = vmatpush.msra.mxu0 0.0
    %219 = vmatpush.msra.mxu0 0.0
    %220 = vmatpush.msra.mxu0 0.0
    %221 = vmatpush.msra.mxu0 0.0
    %222 = vmatpush.msra.mxu0 0.0
    %223 = vmatpush.msra.mxu0 0.0
    %224 = vmatpush.msra.mxu0 0.0
    %225 = vmatpush.msra.mxu0 0.0
    %226 = vmatpush.msra.mxu0 0.0
    %227 = vmatpush.msra.mxu0 0.0
    %228 = vmatpush.msra.mxu0 %v208
    %229 = vmatmul.f32.gmra.mxu0 %v211
    %v230 = vpop.f32.mrf.mxu0
    %v231 = vadd.f32 0.0, %v230
    %232 = vdwg.mxu0
    %233 = vrot.lane.b32.xlu0 %v153, 120
    %v234 = vpop.permute.xlu0 %233
    %235 = vrot.lane.b32.xlu0 %v151, 88
    %v236 = vpop.permute.xlu0 %235
    %v237 = vsel %vm157, %v234, 0
    %v239 = vsel %vm157, %v236, 0
    %241 = vmatpush.xpose.msra.mxu0 0.0
    %242 = vmatpush.xpose.msra.mxu0 0.0
    %243 = vmatpush.xpose.msra.mxu0 0.0
    %244 = vmatpush.xpose.msra.mxu0 0.0
    %245 = vmatpush.xpose.msra.mxu0 0.0
    %246 = vmatpush.xpose.msra.mxu0 0.0
    %247 = vmatpush.xpose.msra.mxu0 0.0
    %248 = vmatpush.xpose.msra.mxu0 0.0
    %249 = vmatpush.xpose.msra.mxu0 0.0
    %250 = vmatpush.xpose.msra.mxu0 0.0
    %251 = vmatpush.xpose.msra.mxu0 0.0
    %252 = vmatpush.xpose.msra.mxu0 0.0
    %253 = vmatpush.xpose.msra.mxu0 0.0
    %254 = vmatpush.xpose.msra.mxu0 0.0
    %255 = vmatpush.xpose.msra.mxu0 0.0
    %256 = vmatpush.xpose.msra.mxu0 %v239
    %257 = vmatmul.f32.gmra.mxu0 %v237
    %v258 = vpop.f32.mrf.mxu0
    %v259 = vadd.f32 %v61, %v258
    %260 = vdwg.mxu0
    %v261 = vsel %vm157, %v259, -inf
    %262 = vmax.xlane.f32.xlu0 %v261
    %v263 = vpop.xlane.xlu0 %262
    %v264 = vsub.f32 %v259, %v263
    %v265 = vmul.f32 %v264, 1.442695
    %v266 = vpow.pop %v265
    %v267 = vsel %vm157, %v266, 0.0
    %268 = vadd.xlane.f32.xlu0 %v267
    %v269 = vpop.xlane.xlu0 %268
    %v270 = vrcp.pop %v269
    %v271 = vmul.f32 %v269, %v270
    %v272 = vsub.f32 1.0, %v271
    %v273 = vmul.f32 %v270, %v272
    %v274 = vadd.f32 %v270, %v273
    %vm275 = vweird.f32 %v269
    %vm276 = vweird.f32 %v270
    %vm277 = vmor %vm275, %vm276
    %v278 = vsel %vm277, %v270, %v274
    %v279 = vand.u32 2147483647, %v269
    %vm280 = vcmp.eq.f32.partialorder %v279, 8.507059e+37
    %v281 = vand.u32 %v269, 2147483648
    %v282 = vor.u32 1.1754944e-38, %v281
    %v283 = vsel %vm280, %v282, %v278
    %v284 = vmul.f32 %v266, %v283
    %285 = vrot.lane.b32.xlu0 %v151, 56
    %v286 = vpop.permute.xlu0 %285
    %v289 = vsel %vm157, %v284, 0
    %291 = vmatpush.msra.mxu0 0.0
    %292 = vmatpush.msra.mxu0 0.0
    %293 = vmatpush.msra.mxu0 0.0
    %294 = vmatpush.msra.mxu0 0.0
    %295 = vmatpush.msra.mxu0 0.0
    %296 = vmatpush.msra.mxu0 0.0
    %297 = vmatpush.msra.mxu0 0.0
    %298 = vmatpush.msra.mxu0 0.0
    %299 = vmatpush.msra.mxu0 0.0
    %300 = vmatpush.msra.mxu0 0.0
    %301 = vmatpush.msra.mxu0 0.0
    %302 = vmatpush.msra.mxu0 0.0
    %303 = vmatpush.msra.mxu0 0.0
    %304 = vmatpush.msra.mxu0 0.0
    %305 = vmatpush.msra.mxu0 0.0
    %306 = vmatpush.msra.mxu0 %v286
    %307 = vmatmul.f32.gmra.mxu0 %v289
    %v308 = vpop.f32.mrf.mxu0
    %v309 = vadd.f32 0.0, %v308
    %310 = vdwg.mxu0
    %311 = vrot.lane.b32.xlu0 %v153, 112
    %v312 = vpop.permute.xlu0 %311
    %313 = vrot.lane.b32.xlu0 %v151, 80
    %v314 = vpop.permute.xlu0 %313
    %v315 = vsel %vm157, %v312, 0
    %v317 = vsel %vm157, %v314, 0
    %319 = vmatpush.xpose.msra.mxu0 0.0
    %320 = vmatpush.xpose.msra.mxu0 0.0
    %321 = vmatpush.xpose.msra.mxu0 0.0
    %322 = vmatpush.xpose.msra.mxu0 0.0
    %323 = vmatpush.xpose.msra.mxu0 0.0
    %324 = vmatpush.xpose.msra.mxu0 0.0
    %325 = vmatpush.xpose.msra.mxu0 0.0
    %326 = vmatpush.xpose.msra.mxu0 0.0
    %327 = vmatpush.xpose.msra.mxu0 0.0
    %328 = vmatpush.xpose.msra.mxu0 0.0
    %329 = vmatpush.xpose.msra.mxu0 0.0
    %330 = vmatpush.xpose.msra.mxu0 0.0
    %331 = vmatpush.xpose.msra.mxu0 0.0
    %332 = vmatpush.xpose.msra.mxu0 0.0
    %333 = vmatpush.xpose.msra.mxu0 0.0
    %334 = vmatpush.xpose.msra.mxu0 %v317
    %335 = vmatmul.f32.gmra.mxu0 %v315
    %v336 = vpop.f32.mrf.mxu0
    %v337 = vadd.f32 %v61, %v336
    %338 = vdwg.mxu0
    %v339 = vsel %vm157, %v337, -inf
    %340 = vmax.xlane.f32.xlu0 %v339
    %v341 = vpop.xlane.xlu0 %340
    %v342 = vsub.f32 %v337, %v341
    %v343 = vmul.f32 %v342, 1.442695
    %v344 = vpow.pop %v343
    %v345 = vsel %vm157, %v344, 0.0
    %346 = vadd.xlane.f32.xlu0 %v345
    %v347 = vpop.xlane.xlu0 %346
    %v348 = vrcp.pop %v347
    %v349 = vmul.f32 %v347, %v348
    %v350 = vsub.f32 1.0, %v349
    %v351 = vmul.f32 %v348, %v350
    %v352 = vadd.f32 %v348, %v351
    %vm353 = vweird.f32 %v347
    %vm354 = vweird.f32 %v348
    %vm355 = vmor %vm353, %vm354
    %v356 = vsel %vm355, %v348, %v352
    %v357 = vand.u32 2147483647, %v347
    %vm358 = vcmp.eq.f32.partialorder %v357, 8.507059e+37
    %v359 = vand.u32 %v347, 2147483648
    %v360 = vor.u32 1.1754944e-38, %v359
    %v361 = vsel %vm358, %v360, %v356
    %v362 = vmul.f32 %v344, %v361
    %363 = vrot.lane.b32.xlu0 %v151, 48
    %v364 = vpop.permute.xlu0 %363
    %v367 = vsel %vm157, %v362, 0
    %369 = vmatpush.msra.mxu0 0.0
    %370 = vmatpush.msra.mxu0 0.0
    %371 = vmatpush.msra.mxu0 0.0
    %372 = vmatpush.msra.mxu0 0.0
    %373 = vmatpush.msra.mxu0 0.0
    %374 = vmatpush.msra.mxu0 0.0
    %375 = vmatpush.msra.mxu0 0.0
    %376 = vmatpush.msra.mxu0 0.0
    %377 = vmatpush.msra.mxu0 0.0
    %378 = vmatpush.msra.mxu0 0.0
    %379 = vmatpush.msra.mxu0 0.0
    %380 = vmatpush.msra.mxu0 0.0
    %381 = vmatpush.msra.mxu0 0.0
    %382 = vmatpush.msra.mxu0 0.0
    %383 = vmatpush.msra.mxu0 0.0
    %384 = vmatpush.msra.mxu0 %v364
    %385 = vmatmul.f32.gmra.mxu0 %v367
    %v386 = vpop.f32.mrf.mxu0
    %v387 = vadd.f32 0.0, %v386
    %388 = vdwg.mxu0
    %389 = vrot.lane.b32.xlu0 %v153, 104
    %v390 = vpop.permute.xlu0 %389
    %391 = vrot.lane.b32.xlu0 %v151, 72
    %v392 = vpop.permute.xlu0 %391
    %v393 = vsel %vm157, %v390, 0
    %v395 = vsel %vm157, %v392, 0
    %397 = vmatpush.xpose.msra.mxu0 0.0
    %398 = vmatpush.xpose.msra.mxu0 0.0
    %399 = vmatpush.xpose.msra.mxu0 0.0
    %400 = vmatpush.xpose.msra.mxu0 0.0
    %401 = vmatpush.xpose.msra.mxu0 0.0
    %402 = vmatpush.xpose.msra.mxu0 0.0
    %403 = vmatpush.xpose.msra.mxu0 0.0
    %404 = vmatpush.xpose.msra.mxu0 0.0
    %405 = vmatpush.xpose.msra.mxu0 0.0
    %406 = vmatpush.xpose.msra.mxu0 0.0
    %407 = vmatpush.xpose.msra.mxu0 0.0
    %408 = vmatpush.xpose.msra.mxu0 0.0
    %409 = vmatpush.xpose.msra.mxu0 0.0
    %410 = vmatpush.xpose.msra.mxu0 0.0
    %411 = vmatpush.xpose.msra.mxu0 0.0
    %412 = vmatpush.xpose.msra.mxu0 %v395
    %413 = vmatmul.f32.gmra.mxu0 %v393
    %v414 = vpop.f32.mrf.mxu0
    %v415 = vadd.f32 %v61, %v414
    %416 = vdwg.mxu0
    %v417 = vsel %vm157, %v415, -inf
    %418 = vmax.xlane.f32.xlu0 %v417
    %v419 = vpop.xlane.xlu0 %418
    %v420 = vsub.f32 %v415, %v419
    %v421 = vmul.f32 %v420, 1.442695
    %v422 = vpow.pop %v421
    %v423 = vsel %vm157, %v422, 0.0
    %424 = vadd.xlane.f32.xlu0 %v423
    %v425 = vpop.xlane.xlu0 %424
    %v426 = vrcp.pop %v425
    %v427 = vmul.f32 %v425, %v426
    %v428 = vsub.f32 1.0, %v427
    %v429 = vmul.f32 %v426, %v428
    %v430 = vadd.f32 %v426, %v429
    %vm431 = vweird.f32 %v425
    %vm432 = vweird.f32 %v426
    %vm433 = vmor %vm431, %vm432
    %v434 = vsel %vm433, %v426, %v430
    %v435 = vand.u32 2147483647, %v425
    %vm436 = vcmp.eq.f32.partialorder %v435, 8.507059e+37
    %v437 = vand.u32 %v425, 2147483648
    %v438 = vor.u32 1.1754944e-38, %v437
    %v439 = vsel %vm436, %v438, %v434
    %v440 = vmul.f32 %v422, %v439
    %441 = vrot.lane.b32.xlu0 %v151, 40
    %v442 = vpop.permute.xlu0 %441
    %v445 = vsel %vm157, %v440, 0
    %447 = vmatpush.msra.mxu0 0.0
    %448 = vmatpush.msra.mxu0 0.0
    %449 = vmatpush.msra.mxu0 0.0
    %450 = vmatpush.msra.mxu0 0.0
    %451 = vmatpush.msra.mxu0 0.0
    %452 = vmatpush.msra.mxu0 0.0
    %453 = vmatpush.msra.mxu0 0.0
    %454 = vmatpush.msra.mxu0 0.0
    %455 = vmatpush.msra.mxu0 0.0
    %456 = vmatpush.msra.mxu0 0.0
    %457 = vmatpush.msra.mxu0 0.0
    %458 = vmatpush.msra.mxu0 0.0
    %459 = vmatpush.msra.mxu0 0.0
    %460 = vmatpush.msra.mxu0 0.0
    %461 = vmatpush.msra.mxu0 0.0
    %462 = vmatpush.msra.mxu0 %v442
    %463 = vmatmul.f32.gmra.mxu0 %v445
    %v464 = vpop.f32.mrf.mxu0
    %v465 = vadd.f32 0.0, %v464
    %466 = vdwg.mxu0
    %468 = vrot.lane.b32.xlu0 %v309, 8
    %v469 = vpop.permute.xlu0 %468
    %472 = vrot.lane.b32.xlu0 %v387, 16
    %v473 = vpop.permute.xlu0 %472
    %476 = vrot.lane.b32.xlu0 %v465, 24
    %v477 = vpop.permute.xlu0 %476
    %v479 = vsel %vm157, %v231, %v469
    %vm480 = vcmask 130048
    %v481 = vsel %vm480, %v479, %v473
    %vm482 = vcmask 195584
    %v483 = vsel %vm482, %v481, %v477
    %488 = vrot.lane.b32.xlu0 %v62, 32
    %v489 = vpop.permute.xlu0 %488
    %490 = vrot.lane.b32.xlu0 %v63, 32
    %v491 = vpop.permute.xlu0 %490
    %492 = vrot.lane.b32.xlu0 %v64, 32
    %v493 = vpop.permute.xlu0 %492
    %494 = vrot.lane.b32.xlu0 %v65, 32
    %v495 = vpop.permute.xlu0 %494
    %501 = vrot.lane.b32.xlu0 %v129, 32
    %v502 = vpop.permute.xlu0 %501
    %v505 = vsel %vm71, %v483, 0
    %507 = vmatpush.msra.mxu0 0.0
    %508 = vmatpush.msra.mxu0 0.0
    %509 = vmatpush.msra.mxu0 0.0
    %510 = vmatpush.msra.mxu0 0.0
    %511 = vmatpush.msra.mxu0 0.0
    %512 = vmatpush.msra.mxu0 0.0
    %513 = vmatpush.msra.mxu0 0.0
    %514 = vmatpush.msra.mxu0 0.0
    %515 = vmatpush.msra.mxu0 0.0
    %516 = vmatpush.msra.mxu0 0.0
    %517 = vmatpush.msra.mxu0 0.0
    %518 = vmatpush.msra.mxu0 0.0
    %519 = vmatpush.msra.mxu0 %v495
    %520 = vmatpush.msra.mxu0 %v493
    %521 = vmatpush.msra.mxu0 %v491
    %522 = vmatpush.msra.mxu0 %v489
    %523 = vmatmul.f32.gmra.mxu0 %v505
    %v524 = vpop.f32.mrf.mxu0
    %v525 = vadd.f32 %v502, %v524
    %526 = vdwg.mxu0
    %v527 = vadd.f32 %v58, %v525
    %v528 = vsel %vm71, %v527, 0.0
    %529 = vadd.xlane.f32.xlu0 %v528
    %v530 = vpop.xlane.xlu0 %529
    %v531 = vmul.f32 %v530, %v81
    %v532 = vsub.f32 %v527, %v531
    %v533 = vmul.f32 %v532, %v532
    %v534 = vsel %vm71, %v533, 0.0
    %535 = vadd.xlane.f32.xlu0 %v534
    %v536 = vpop.xlane.xlu0 %535
    %v537 = vmul.f32 %v536, 0.032258064
    %v538 = vrsqrt.pop %v537
    %v539 = vmul.f32 %v538, %v537
    %v540 = vmul.f32 %v539, %v538
    %v541 = vmul.f32 0.5, %v540
    %v542 = vsub.f32 1.5, %v541
    %v543 = vmul.f32 %v538, %v542
    %v544 = vmul.f32 %v537, %v543
    %vm545 = vcmp.eq.f32.partialorder %v537, inf
    %v546 = vsel %vm545, %v537, %v544
    %vm547 = vcmp.eq.f32.partialorder %v537, 0.0
    %v548 = vand.u32 %v537, 2147483648
    %v549 = vsel %vm547, %v548, %v546
    %v550 = vadd.f32 %v549, 1e-06
    %v551 = vrcp.pop %v550
    %v552 = vmul.f32 %v550, %v551
    %v553 = vsub.f32 1.0, %v552
    %v554 = vmul.f32 %v551, %v553
    %v555 = vadd.f32 %v551, %v554
    %vm556 = vweird.f32 %v550
    %vm557 = vweird.f32 %v551
    %vm558 = vmor %vm556, %vm557
    %v559 = vsel %vm558, %v551, %v555
    %v560 = vand.u32 2147483647, %v550
    %vm561 = vcmp.eq.f32.partialorder %v560, 8.507059e+37
    %v562 = vand.u32 %v550, 2147483648
    %v563 = vor.u32 1.1754944e-38, %v562
    %v564 = vsel %vm561, %v563, %v559
    %565 = vrot.lane.b32.xlu0 %v117, 126
    %v566 = vpop.permute.xlu0 %565
    %s567 = vtos %v566
    %v568 = vstv %s567
    %v570 = vmul.f32 %v568, %v532
    %v571 = vmul.f32 %v570, %v564
    %572 = vrot.lane.b32.xlu0 %v117, 125
    %v573 = vpop.permute.xlu0 %572
    %s574 = vtos %v573
    %v575 = vstv %s574
    %v577 = vadd.f32 %v571, %v575
    %v578 = vperm.slane %v70, 1
    %v580 = vsel %vm71, %v577, 0
    %582 = vmatpush.msra.mxu0 0.0
    %583 = vmatpush.msra.mxu0 0.0
    %584 = vmatpush.msra.mxu0 0.0
    %585 = vmatpush.msra.mxu0 0.0
    %586 = vmatpush.msra.mxu0 0.0
    %587 = vmatpush.msra.mxu0 0.0
    %588 = vmatpush.msra.mxu0 0.0
    %589 = vmatpush.msra.mxu0 0.0
    %590 = vmatpush.msra.mxu0 0.0
    %591 = vmatpush.msra.mxu0 0.0
    %592 = vmatpush.msra.mxu0 0.0
    %593 = vmatpush.msra.mxu0 0.0
    %594 = vmatpush.msra.mxu0 %v69
    %595 = vmatpush.msra.mxu0 %v68
    %596 = vmatpush.msra.mxu0 %v67
    %597 = vmatpush.msra.mxu0 %v66
    %598 = vmatmul.f32.gmra.mxu0 %v580
    %v599 = vpop.f32.mrf.mxu0
    %v600 = vadd.f32 %v578, %v599
    %601 = vdwg.mxu0
    %v602 = vmax.f32 %v600, 0.0
    %607 = vrot.lane.b32.xlu0 %v66, 64
    %v608 = vpop.permute.xlu0 %607
    %609 = vrot.lane.b32.xlu0 %v67, 64
    %v610 = vpop.permute.xlu0 %609
    %611 = vrot.lane.b32.xlu0 %v68, 64
    %v612 = vpop.permute.xlu0 %611
    %613 = vrot.lane.b32.xlu0 %v69, 64
    %v614 = vpop.permute.xlu0 %613
    %616 = vrot.lane.b32.xlu0 %v578, 64
    %v617 = vpop.permute.xlu0 %616
    %vm619 = vcmask 523264
    %v621 = vsel %vm619, %v602, 0
    %v623 = vsel %vm619, %v608, 0
    %v625 = vsel %vm619, %v610, 0
    %v627 = vsel %vm619, %v612, 0
    %v629 = vsel %vm619, %v614, 0
    %631 = vmatpush.xpose.msra.mxu0 0.0
    %632 = vmatpush.xpose.msra.mxu0 0.0
    %633 = vmatpush.xpose.msra.mxu0 0.0
    %634 = vmatpush.xpose.msra.mxu0 0.0
    %635 = vmatpush.xpose.msra.mxu0 0.0
    %636 = vmatpush.xpose.msra.mxu0 0.0
    %637 = vmatpush.xpose.msra.mxu0 0.0
    %638 = vmatpush.xpose.msra.mxu0 0.0
    %639 = vmatpush.xpose.msra.mxu0 0.0
    %640 = vmatpush.xpose.msra.mxu0 0.0
    %641 = vmatpush.xpose.msra.mxu0 0.0
    %642 = vmatpush.xpose.msra.mxu0 0.0
    %643 = vmatpush.xpose.msra.mxu0 %v629
    %644 = vmatpush.xpose.msra.mxu0 %v627
    %645 = vmatpush.xpose.msra.mxu0 %v625
    %646 = vmatpush.xpose.msra.mxu0 %v623
    %647 = vmatmul.f32.gmra.mxu0 %v621
    %v648 = vpop.f32.mrf.mxu0
    %v649 = vadd.f32 %v617, %v648
    %650 = vdwg.mxu0
    %v651 = vadd.f32 %v527, %v649
    %652 = vst.msk [vmem:[#allocation8] sm:$0xff] %vm71, %v651
    // Predicated region
    $region26: #{tpu_custom_call.1} parent=1 // pred_check
      _
    $region27: #{tpu_custom_call.1} parent=1 // pred_check_branch
      %654 = sbr.rel (0) target = $region29
    $region28: #{tpu_custom_call.1} parent=1 // pred_region
      %656 = vsyncadd [#allocation4], 0
      %s658 = sshll.u32 [#allocation8], 4
      %s659 = int_to_ptr.vmem [resolvable:$true] %s658
      %s660 = sshll.u32 %s3, 4
      %s661 = int_to_ptr.hbm [resolvable:$true] %s660
      %663 = dma.vmem_to_hbm [thread:$0]  %s659, 128, %s661, [#allocation4]
    $region29: #{tpu_custom_call.1} parent=1 // pred_fallthru
      _
    // Predicated region
    $region30: #{tpu_custom_call.1} parent=1 // pred_check
      _
    $region31: #{tpu_custom_call.1} parent=1 // pred_check_branch
      %665 = sbr.rel (0) target = $region33
    $region32: #{tpu_custom_call.1} parent=1 // pred_region
      %667 = dma.done [#allocation4], 128
    $region33: #{tpu_custom_call.1} parent=1 // pred_fallthru
      _
    %668 = vsyncpa [#allocation3], 1
    %669 = vsyncpa [#allocation6], 1
    %670 = vsyncpa [#allocation4], 1

</llo_original>
